<compile_context>
chip_gen: v5e
topology: v5e:2x2
jax: 0.10.0
libtpu: 0.0.40
codegen_flags: <defaults>
</compile_context>

<pallas_src>
import functools

import jax
import jax.numpy as jnp
from jax.experimental import pallas as pl
from jax.experimental.pallas import tpu as pltpu  # noqa: F401  (imported per convention)


def _pos2d_kernel(col_t_ref, row_t_ref, o_ref, *, h, w, f):
    """Channel-major learned 2D position embedding.

    col_t_ref: (f, w)    = col_embed(arange(w)).T   (channel-major slice)
    row_t_ref: (f, h)    = row_embed(arange(h)).T
    o_ref:     (2f, h*w) with o[c, y*w + x] = col_t[c, x]      for c <  f
                              o[c, y*w + x] = row_t[c - f, y]  for c >= f
    """
    col = col_t_ref[...]                                   # (f, w), load once
    row = row_t_ref[...]                                   # (f, h), load once
    # Per-row stores into the lane-dense (h*w-wide) output block.  The two
    # halves are written directly (no concat temporary); the output VMEM block
    # has no lane padding, so writeback to HBM is a single dense burst.
    for y in range(h):
        sl = slice(y * w, (y + 1) * w)
        o_ref[:f, sl] = col                                            # x_emb half
        o_ref[f:, sl] = jnp.broadcast_to(row[:, y:y + 1], (f, w))      # y_emb half


def position_embedding_learned(col_weight, row_weight, x):
    """JAX/Pallas equivalent of PositionEmbeddingLearned.forward(NestedTensor(x, mask)).

    col_weight, row_weight: (50, num_pos_feats) learned embedding tables.
    x: only its shape is used (the NestedTensor mask is unused by the module).
    Returns pos of shape (B, 2*num_pos_feats, h, w).
    """
    batch = x.shape[0]
    h, w = x.shape[-2], x.shape[-1]
    n_tab, f = col_weight.shape
    assert row_weight.shape == (n_tab, f), "table shape mismatch"
    assert row_weight.dtype == col_weight.dtype, "table dtype mismatch"
    assert h <= n_tab and w <= n_tab, "spatial size exceeds embedding table length"

    # Tiny (<=50, f) slice+transpose done in the wrapper (negligible, const-folds
    # when the weights are constants); lets the kernel emit the final
    # channel-major layout directly, removing the old full-slab relayout pass.
    col_t = col_weight[:w].T                               # (f, w)
    row_t = row_weight[:h].T                               # (f, h)

    pos_flat = pl.pallas_call(
        functools.partial(_pos2d_kernel, h=h, w=w, f=f),
        out_shape=jax.ShapeDtypeStruct((2 * f, h * w), col_weight.dtype),
        in_specs=[
            pl.BlockSpec((f, w), lambda: (0, 0)),          # full col table slice in VMEM
            pl.BlockSpec((f, h), lambda: (0, 0)),          # full row table slice in VMEM
        ],
        out_specs=pl.BlockSpec((2 * f, h * w), lambda: (0, 0)),
    )(col_t, row_t)

    # (2f, h*w) -> (2f, h, w): identical row-major layout, free reshape (no relayout).
    pos = pos_flat.reshape(2 * f, h, w)
    # Batch repeat stays lazy so the consumer can fuse it instead of paying
    # B extra HBM passes over identical data.
    return jnp.broadcast_to(pos[None], (batch, 2 * f, h, w))


if __name__ == "__main__":
    key = jax.random.PRNGKey(0)
    num_pos_feats = 32
    batch, channels, height, width = 2, 4, 16, 16

    k_row, k_col, k_x = jax.random.split(key, 3)
    # nn.init.uniform_ -> U[0, 1)
    row_w = jax.random.uniform(k_row, (50, num_pos_feats), dtype=jnp.float32)
    col_w = jax.random.uniform(k_col, (50, num_pos_feats), dtype=jnp.float32)
    x = jax.random.normal(k_x, (batch, channels, height, width), dtype=jnp.float32)
    # NestedTensor mask is never used by PositionEmbeddingLearned.forward.

    out = jax.block_until_ready(position_embedding_learned(col_w, row_w, x))

    # Pure-JAX reference with exact PyTorch semantics.
    i = jnp.arange(width)
    j = jnp.arange(height)
    x_emb = col_w[i]                                           # (w, F)
    y_emb = row_w[j]                                           # (h, F)
    ref = jnp.concatenate(
        [
            jnp.tile(x_emb[None, :, :], (height, 1, 1)),       # (h, w, F)
            jnp.tile(y_emb[:, None, :], (1, width, 1)),        # (h, w, F)
        ],
        axis=-1,
    )                                                          # (h, w, 2F)
    ref = jnp.tile(jnp.transpose(ref, (2, 0, 1))[None], (batch, 1, 1, 1))

    assert out.shape == (batch, 2 * num_pos_feats, height, width), out.shape
    assert jnp.allclose(out, ref), "mismatch vs reference"

    print("KERNEL_OK")
</pallas_src>

<mosaic_0001>
module attributes {stable_mosaic.version = 11 : i64} {
  func.func @_pos2d_kernel(%arg0: memref<32x16xf32, #tpu.memory_space<vmem>>, %arg1: memref<32x16xf32, #tpu.memory_space<vmem>>, %arg2: memref<64x256xf32, #tpu.memory_space<vmem>>) attributes {dimension_semantics = [], scalar_prefetch = 0 : i64, scratch_operands = 0 : i64, tpu.core_type = #tpu.core_type<tc>} {
    %c0 = arith.constant 0 : index
    %c0_0 = arith.constant 0 : index
    %0 = vector.load %arg0[%c0, %c0_0] : memref<32x16xf32, #tpu.memory_space<vmem>>, vector<32x16xf32>
    %c0_1 = arith.constant 0 : index
    %c0_2 = arith.constant 0 : index
    %1 = vector.load %arg1[%c0_1, %c0_2] : memref<32x16xf32, #tpu.memory_space<vmem>>, vector<32x16xf32>
    %c0_3 = arith.constant 0 : index
    %c0_4 = arith.constant 0 : index
    %2 = vector.load %arg2[%c0_3, %c0_4] : memref<64x256xf32, #tpu.memory_space<vmem>>, vector<32x16xf32>
    tpu.vector_store %arg2[%c0_3, %c0_4], %0 {strides = array<i32>} : memref<64x256xf32, #tpu.memory_space<vmem>>, vector<32x16xf32>,
    %3 = vector.extract_strided_slice %1 {offsets = [0, 0], sizes = [32, 1], strides = [1, 1]} : vector<32x16xf32> to vector<32x1xf32>
    %4 = vector.shape_cast %3 : vector<32x1xf32> to vector<32x1xf32>
    %5 = vector.broadcast %4 : vector<32x1xf32> to vector<32x16xf32>
    %c32 = arith.constant 32 : index
    %c0_5 = arith.constant 0 : index
    %6 = vector.load %arg2[%c32, %c0_5] : memref<64x256xf32, #tpu.memory_space<vmem>>, vector<32x16xf32>
    tpu.vector_store %arg2[%c32, %c0_5], %5 {strides = array<i32>} : memref<64x256xf32, #tpu.memory_space<vmem>>, vector<32x16xf32>,
    %c0_6 = arith.constant 0 : index
    %c16 = arith.constant 16 : index
    %7 = vector.load %arg2[%c0_6, %c16] : memref<64x256xf32, #tpu.memory_space<vmem>>, vector<32x16xf32>
    tpu.vector_store %arg2[%c0_6, %c16], %0 {strides = array<i32>} : memref<64x256xf32, #tpu.memory_space<vmem>>, vector<32x16xf32>,
    %8 = vector.extract_strided_slice %1 {offsets = [0, 1], sizes = [32, 1], strides = [1, 1]} : vector<32x16xf32> to vector<32x1xf32>
    %9 = vector.shape_cast %8 : vector<32x1xf32> to vector<32x1xf32>
    %10 = vector.broadcast %9 : vector<32x1xf32> to vector<32x16xf32>
    %c32_7 = arith.constant 32 : index
    %c16_8 = arith.constant 16 : index
    %11 = vector.load %arg2[%c32_7, %c16_8] : memref<64x256xf32, #tpu.memory_space<vmem>>, vector<32x16xf32>
    tpu.vector_store %arg2[%c32_7, %c16_8], %10 {strides = array<i32>} : memref<64x256xf32, #tpu.memory_space<vmem>>, vector<32x16xf32>,
    %c0_9 = arith.constant 0 : index
    %c32_10 = arith.constant 32 : index
    %12 = vector.load %arg2[%c0_9, %c32_10] : memref<64x256xf32, #tpu.memory_space<vmem>>, vector<32x16xf32>
    tpu.vector_store %arg2[%c0_9, %c32_10], %0 {strides = array<i32>} : memref<64x256xf32, #tpu.memory_space<vmem>>, vector<32x16xf32>,
    %13 = vector.extract_strided_slice %1 {offsets = [0, 2], sizes = [32, 1], strides = [1, 1]} : vector<32x16xf32> to vector<32x1xf32>
    %14 = vector.shape_cast %13 : vector<32x1xf32> to vector<32x1xf32>
    %15 = vector.broadcast %14 : vector<32x1xf32> to vector<32x16xf32>
    %c32_11 = arith.constant 32 : index
    %c32_12 = arith.constant 32 : index
    %16 = vector.load %arg2[%c32_11, %c32_12] : memref<64x256xf32, #tpu.memory_space<vmem>>, vector<32x16xf32>
    tpu.vector_store %arg2[%c32_11, %c32_12], %15 {strides = array<i32>} : memref<64x256xf32, #tpu.memory_space<vmem>>, vector<32x16xf32>,
    %c0_13 = arith.constant 0 : index
    %c48 = arith.constant 48 : index
    %17 = vector.load %arg2[%c0_13, %c48] : memref<64x256xf32, #tpu.memory_space<vmem>>, vector<32x16xf32>
    tpu.vector_store %arg2[%c0_13, %c48], %0 {strides = array<i32>} : memref<64x256xf32, #tpu.memory_space<vmem>>, vector<32x16xf32>,
    %18 = vector.extract_strided_slice %1 {offsets = [0, 3], sizes = [32, 1], strides = [1, 1]} : vector<32x16xf32> to vector<32x1xf32>
    %19 = vector.shape_cast %18 : vector<32x1xf32> to vector<32x1xf32>
    %20 = vector.broadcast %19 : vector<32x1xf32> to vector<32x16xf32>
    %c32_14 = arith.constant 32 : index
    %c48_15 = arith.constant 48 : index
    %21 = vector.load %arg2[%c32_14, %c48_15] : memref<64x256xf32, #tpu.memory_space<vmem>>, vector<32x16xf32>
    tpu.vector_store %arg2[%c32_14, %c48_15], %20 {strides = array<i32>} : memref<64x256xf32, #tpu.memory_space<vmem>>, vector<32x16xf32>,
    %c0_16 = arith.constant 0 : index
    %c64 = arith.constant 64 : index
    %22 = vector.load %arg2[%c0_16, %c64] : memref<64x256xf32, #tpu.memory_space<vmem>>, vector<32x16xf32>
    tpu.vector_store %arg2[%c0_16, %c64], %0 {strides = array<i32>} : memref<64x256xf32, #tpu.memory_space<vmem>>, vector<32x16xf32>,
    %23 = vector.extract_strided_slice %1 {offsets = [0, 4], sizes = [32, 1], strides = [1, 1]} : vector<32x16xf32> to vector<32x1xf32>
    %24 = vector.shape_cast %23 : vector<32x1xf32> to vector<32x1xf32>
    %25 = vector.broadcast %24 : vector<32x1xf32> to vector<32x16xf32>
    %c32_17 = arith.constant 32 : index
    %c64_18 = arith.constant 64 : index
    %26 = vector.load %arg2[%c32_17, %c64_18] : memref<64x256xf32, #tpu.memory_space<vmem>>, vector<32x16xf32>
    tpu.vector_store %arg2[%c32_17, %c64_18], %25 {strides = array<i32>} : memref<64x256xf32, #tpu.memory_space<vmem>>, vector<32x16xf32>,
    %c0_19 = arith.constant 0 : index
    %c80 = arith.constant 80 : index
    %27 = vector.load %arg2[%c0_19, %c80] : memref<64x256xf32, #tpu.memory_space<vmem>>, vector<32x16xf32>
    tpu.vector_store %arg2[%c0_19, %c80], %0 {strides = array<i32>} : memref<64x256xf32, #tpu.memory_space<vmem>>, vector<32x16xf32>,
    %28 = vector.extract_strided_slice %1 {offsets = [0, 5], sizes = [32, 1], strides = [1, 1]} : vector<32x16xf32> to vector<32x1xf32>
    %29 = vector.shape_cast %28 : vector<32x1xf32> to vector<32x1xf32>
    %30 = vector.broadcast %29 : vector<32x1xf32> to vector<32x16xf32>
    %c32_20 = arith.constant 32 : index
    %c80_21 = arith.constant 80 : index
    %31 = vector.load %arg2[%c32_20, %c80_21] : memref<64x256xf32, #tpu.memory_space<vmem>>, vector<32x16xf32>
    tpu.vector_store %arg2[%c32_20, %c80_21], %30 {strides = array<i32>} : memref<64x256xf32, #tpu.memory_space<vmem>>, vector<32x16xf32>,
    %c0_22 = arith.constant 0 : index
    %c96 = arith.constant 96 : index
    %32 = vector.load %arg2[%c0_22, %c96] : memref<64x256xf32, #tpu.memory_space<vmem>>, vector<32x16xf32>
    tpu.vector_store %arg2[%c0_22, %c96], %0 {strides = array<i32>} : memref<64x256xf32, #tpu.memory_space<vmem>>, vector<32x16xf32>,
    %33 = vector.extract_strided_slice %1 {offsets = [0, 6], sizes = [32, 1], strides = [1, 1]} : vector<32x16xf32> to vector<32x1xf32>
    %34 = vector.shape_cast %33 : vector<32x1xf32> to vector<32x1xf32>
    %35 = vector.broadcast %34 : vector<32x1xf32> to vector<32x16xf32>
    %c32_23 = arith.constant 32 : index
    %c96_24 = arith.constant 96 : index
    %36 = vector.load %arg2[%c32_23, %c96_24] : memref<64x256xf32, #tpu.memory_space<vmem>>, vector<32x16xf32>
    tpu.vector_store %arg2[%c32_23, %c96_24], %35 {strides = array<i32>} : memref<64x256xf32, #tpu.memory_space<vmem>>, vector<32x16xf32>,
    %c0_25 = arith.constant 0 : index
    %c112 = arith.constant 112 : index
    %37 = vector.load %arg2[%c0_25, %c112] : memref<64x256xf32, #tpu.memory_space<vmem>>, vector<32x16xf32>
    tpu.vector_store %arg2[%c0_25, %c112], %0 {strides = array<i32>} : memref<64x256xf32, #tpu.memory_space<vmem>>, vector<32x16xf32>,
    %38 = vector.extract_strided_slice %1 {offsets = [0, 7], sizes = [32, 1], strides = [1, 1]} : vector<32x16xf32> to vector<32x1xf32>
    %39 = vector.shape_cast %38 : vector<32x1xf32> to vector<32x1xf32>
    %40 = vector.broadcast %39 : vector<32x1xf32> to vector<32x16xf32>
    %c32_26 = arith.constant 32 : index
    %c112_27 = arith.constant 112 : index
    %41 = vector.load %arg2[%c32_26, %c112_27] : memref<64x256xf32, #tpu.memory_space<vmem>>, vector<32x16xf32>
    tpu.vector_store %arg2[%c32_26, %c112_27], %40 {strides = array<i32>} : memref<64x256xf32, #tpu.memory_space<vmem>>, vector<32x16xf32>,
    %c0_28 = arith.constant 0 : index
    %c128 = arith.constant 128 : index
    %42 = vector.load %arg2[%c0_28, %c128] : memref<64x256xf32, #tpu.memory_space<vmem>>, vector<32x16xf32>
    tpu.vector_store %arg2[%c0_28, %c128], %0 {strides = array<i32>} : memref<64x256xf32, #tpu.memory_space<vmem>>, vector<32x16xf32>,
    %43 = vector.extract_strided_slice %1 {offsets = [0, 8], sizes = [32, 1], strides = [1, 1]} : vector<32x16xf32> to vector<32x1xf32>
    %44 = vector.shape_cast %43 : vector<32x1xf32> to vector<32x1xf32>
    %45 = vector.broadcast %44 : vector<32x1xf32> to vector<32x16xf32>
    %c32_29 = arith.constant 32 : index
    %c128_30 = arith.constant 128 : index
    %46 = vector.load %arg2[%c32_29, %c128_30] : memref<64x256xf32, #tpu.memory_space<vmem>>, vector<32x16xf32>
    tpu.vector_store %arg2[%c32_29, %c128_30], %45 {strides = array<i32>} : memref<64x256xf32, #tpu.memory_space<vmem>>, vector<32x16xf32>,
    %c0_31 = arith.constant 0 : index
    %c144 = arith.constant 144 : index
    %47 = vector.load %arg2[%c0_31, %c144] : memref<64x256xf32, #tpu.memory_space<vmem>>, vector<32x16xf32>
    tpu.vector_store %arg2[%c0_31, %c144], %0 {strides = array<i32>} : memref<64x256xf32, #tpu.memory_space<vmem>>, vector<32x16xf32>,
    %48 = vector.extract_strided_slice %1 {offsets = [0, 9], sizes = [32, 1], strides = [1, 1]} : vector<32x16xf32> to vector<32x1xf32>
    %49 = vector.shape_cast %48 : vector<32x1xf32> to vector<32x1xf32>
    %50 = vector.broadcast %49 : vector<32x1xf32> to vector<32x16xf32>
    %c32_32 = arith.constant 32 : index
    %c144_33 = arith.constant 144 : index
    %51 = vector.load %arg2[%c32_32, %c144_33] : memref<64x256xf32, #tpu.memory_space<vmem>>, vector<32x16xf32>
    tpu.vector_store %arg2[%c32_32, %c144_33], %50 {strides = array<i32>} : memref<64x256xf32, #tpu.memory_space<vmem>>, vector<32x16xf32>,
    %c0_34 = arith.constant 0 : index
    %c160 = arith.constant 160 : index
    %52 = vector.load %arg2[%c0_34, %c160] : memref<64x256xf32, #tpu.memory_space<vmem>>, vector<32x16xf32>
    tpu.vector_store %arg2[%c0_34, %c160], %0 {strides = array<i32>} : memref<64x256xf32, #tpu.memory_space<vmem>>, vector<32x16xf32>,
    %53 = vector.extract_strided_slice %1 {offsets = [0, 10], sizes = [32, 1], strides = [1, 1]} : vector<32x16xf32> to vector<32x1xf32>
    %54 = vector.shape_cast %53 : vector<32x1xf32> to vector<32x1xf32>
    %55 = vector.broadcast %54 : vector<32x1xf32> to vector<32x16xf32>
    %c32_35 = arith.constant 32 : index
    %c160_36 = arith.constant 160 : index
    %56 = vector.load %arg2[%c32_35, %c160_36] : memref<64x256xf32, #tpu.memory_space<vmem>>, vector<32x16xf32>
    tpu.vector_store %arg2[%c32_35, %c160_36], %55 {strides = array<i32>} : memref<64x256xf32, #tpu.memory_space<vmem>>, vector<32x16xf32>,
    %c0_37 = arith.constant 0 : index
    %c176 = arith.constant 176 : index
    %57 = vector.load %arg2[%c0_37, %c176] : memref<64x256xf32, #tpu.memory_space<vmem>>, vector<32x16xf32>
    tpu.vector_store %arg2[%c0_37, %c176], %0 {strides = array<i32>} : memref<64x256xf32, #tpu.memory_space<vmem>>, vector<32x16xf32>,
    %58 = vector.extract_strided_slice %1 {offsets = [0, 11], sizes = [32, 1], strides = [1, 1]} : vector<32x16xf32> to vector<32x1xf32>
    %59 = vector.shape_cast %58 : vector<32x1xf32> to vector<32x1xf32>
    %60 = vector.broadcast %59 : vector<32x1xf32> to vector<32x16xf32>
    %c32_38 = arith.constant 32 : index
    %c176_39 = arith.constant 176 : index
    %61 = vector.load %arg2[%c32_38, %c176_39] : memref<64x256xf32, #tpu.memory_space<vmem>>, vector<32x16xf32>
    tpu.vector_store %arg2[%c32_38, %c176_39], %60 {strides = array<i32>} : memref<64x256xf32, #tpu.memory_space<vmem>>, vector<32x16xf32>,
    %c0_40 = arith.constant 0 : index
    %c192 = arith.constant 192 : index
    %62 = vector.load %arg2[%c0_40, %c192] : memref<64x256xf32, #tpu.memory_space<vmem>>, vector<32x16xf32>
    tpu.vector_store %arg2[%c0_40, %c192], %0 {strides = array<i32>} : memref<64x256xf32, #tpu.memory_space<vmem>>, vector<32x16xf32>,
    %63 = vector.extract_strided_slice %1 {offsets = [0, 12], sizes = [32, 1], strides = [1, 1]} : vector<32x16xf32> to vector<32x1xf32>
    %64 = vector.shape_cast %63 : vector<32x1xf32> to vector<32x1xf32>
    %65 = vector.broadcast %64 : vector<32x1xf32> to vector<32x16xf32>
    %c32_41 = arith.constant 32 : index
    %c192_42 = arith.constant 192 : index
    %66 = vector.load %arg2[%c32_41, %c192_42] : memref<64x256xf32, #tpu.memory_space<vmem>>, vector<32x16xf32>
    tpu.vector_store %arg2[%c32_41, %c192_42], %65 {strides = array<i32>} : memref<64x256xf32, #tpu.memory_space<vmem>>, vector<32x16xf32>,
    %c0_43 = arith.constant 0 : index
    %c208 = arith.constant 208 : index
    %67 = vector.load %arg2[%c0_43, %c208] : memref<64x256xf32, #tpu.memory_space<vmem>>, vector<32x16xf32>
    tpu.vector_store %arg2[%c0_43, %c208], %0 {strides = array<i32>} : memref<64x256xf32, #tpu.memory_space<vmem>>, vector<32x16xf32>,
    %68 = vector.extract_strided_slice %1 {offsets = [0, 13], sizes = [32, 1], strides = [1, 1]} : vector<32x16xf32> to vector<32x1xf32>
    %69 = vector.shape_cast %68 : vector<32x1xf32> to vector<32x1xf32>
    %70 = vector.broadcast %69 : vector<32x1xf32> to vector<32x16xf32>
    %c32_44 = arith.constant 32 : index
    %c208_45 = arith.constant 208 : index
    %71 = vector.load %arg2[%c32_44, %c208_45] : memref<64x256xf32, #tpu.memory_space<vmem>>, vector<32x16xf32>
    tpu.vector_store %arg2[%c32_44, %c208_45], %70 {strides = array<i32>} : memref<64x256xf32, #tpu.memory_space<vmem>>, vector<32x16xf32>,
    %c0_46 = arith.constant 0 : index
    %c224 = arith.constant 224 : index
    %72 = vector.load %arg2[%c0_46, %c224] : memref<64x256xf32, #tpu.memory_space<vmem>>, vector<32x16xf32>
    tpu.vector_store %arg2[%c0_46, %c224], %0 {strides = array<i32>} : memref<64x256xf32, #tpu.memory_space<vmem>>, vector<32x16xf32>,
    %73 = vector.extract_strided_slice %1 {offsets = [0, 14], sizes = [32, 1], strides = [1, 1]} : vector<32x16xf32> to vector<32x1xf32>
    %74 = vector.shape_cast %73 : vector<32x1xf32> to vector<32x1xf32>
    %75 = vector.broadcast %74 : vector<32x1xf32> to vector<32x16xf32>
    %c32_47 = arith.constant 32 : index
    %c224_48 = arith.constant 224 : index
    %76 = vector.load %arg2[%c32_47, %c224_48] : memref<64x256xf32, #tpu.memory_space<vmem>>, vector<32x16xf32>
    tpu.vector_store %arg2[%c32_47, %c224_48], %75 {strides = array<i32>} : memref<64x256xf32, #tpu.memory_space<vmem>>, vector<32x16xf32>,
    %c0_49 = arith.constant 0 : index
    %c240 = arith.constant 240 : index
    %77 = vector.load %arg2[%c0_49, %c240] : memref<64x256xf32, #tpu.memory_space<vmem>>, vector<32x16xf32>
    tpu.vector_store %arg2[%c0_49, %c240], %0 {strides = array<i32>} : memref<64x256xf32, #tpu.memory_space<vmem>>, vector<32x16xf32>,
    %78 = vector.extract_strided_slice %1 {offsets = [0, 15], sizes = [32, 1], strides = [1, 1]} : vector<32x16xf32> to vector<32x1xf32>
    %79 = vector.shape_cast %78 : vector<32x1xf32> to vector<32x1xf32>
    %80 = vector.broadcast %79 : vector<32x1xf32> to vector<32x16xf32>
    %c32_50 = arith.constant 32 : index
    %c240_51 = arith.constant 240 : index
    %81 = vector.load %arg2[%c32_50, %c240_51] : memref<64x256xf32, #tpu.memory_space<vmem>>, vector<32x16xf32>
    tpu.vector_store %arg2[%c32_50, %c240_51], %80 {strides = array<i32>} : memref<64x256xf32, #tpu.memory_space<vmem>>, vector<32x16xf32>,
    return
  }
}

</mosaic_0001>

<llo_original>
// kernel: tpu_custom_call.1
$region0: #{tpu_custom_call.1}
  #allocation0 [shape = 'u32[]', space=smem, size = 0x4, offset = 0x4, fixed_abs, tag = 'smem constant byte address 0x4 - core index']
  #allocation1 [shape = 'u32[72,128]{1,0:T(1,128)}', space=vmem, size = 0x9000, scoped, tag = 'internal scratch']
  %s0 = inlined_call_operand.vmem [shape: f32[32,16], index: 0, kind: input, shape index: {}]
  %s1 = inlined_call_operand.vmem [shape: f32[32,16], index: 1, kind: input, shape index: {}]
  %s2 = inlined_call_operand.hbm [shape: f32[64,256], index: 2, kind: output, shape index: {}]
  %s3 = sld [smem:[#allocation0]]
  $region18: #{tpu_custom_call.1} parent=0
    _
  %s5 = ssub.s32 1, %s3
  %s6 = scalar_select 0, %s5, %s3
  $region1: #{tpu_custom_call.1} parent=0
    #allocation2 [shape = 'u8[65536]{0}', space=vmem, size = 0x10000, scoped, tag = 'output window, operand 0, single buffered']
    #allocation3 [shape = 's32[1]{0}', space=sflag, size = 0x4, scoped, tag = 'scoped memory for tpu_custom_call.1']
    %7 = vsyncpa [#allocation3], 0
    // Predicated region
    $region2: #{tpu_custom_call.1} parent=1 // pred_check
      _
    $region3: #{tpu_custom_call.1} parent=1 // pred_check_branch
      %9 = sbr.rel (0) target = $region5
    $region4: #{tpu_custom_call.1} parent=1 // pred_region
      _
    $region5: #{tpu_custom_call.1} parent=1 // pred_fallthru
      _
    // Predicated region
    $region6: #{tpu_custom_call.1} parent=1 // pred_check
      _
    $region7: #{tpu_custom_call.1} parent=1 // pred_check_branch
      %11 = sbr.rel (0) target = $region9
    $region8: #{tpu_custom_call.1} parent=1 // pred_region
      _
    $region9: #{tpu_custom_call.1} parent=1 // pred_fallthru
      _
    %v12 = vld [vmem:[%s0] sm:$0xff]
    %v13 = vld [vmem:[%s0 + $0x8] sm:$0xff]
    %v14 = vld [vmem:[%s0 + $0x10] sm:$0xff]
    %v15 = vld [vmem:[%s0 + $0x18] sm:$0xff]
    %v16 = vld [vmem:[%s1] sm:$0xff]
    %v17 = vld [vmem:[%s1 + $0x8] sm:$0xff]
    %v18 = vld [vmem:[%s1 + $0x10] sm:$0xff]
    %v19 = vld [vmem:[%s1 + $0x18] sm:$0xff]
    %vm20 = vcmask 130048
    %21 = vst.msk [vmem:[#allocation2] sm:$0xff] %vm20, %v12
    %22 = vst.msk [vmem:[#allocation2 + $0x10] sm:$0xff] %vm20, %v13
    %23 = vst.msk [vmem:[#allocation2 + $0x20] sm:$0xff] %vm20, %v14
    %24 = vst.msk [vmem:[#allocation2 + $0x30] sm:$0xff] %vm20, %v15
    %26 = vset.pattern.permute.xlu0 0
    %27 = vperm.xlu0 %26, %v16
    %v28 = vpop.permute.xlu0 %27
    %31 = vset.pattern.permute.xlu0 0
    %32 = vperm.xlu0 %31, %v17
    %v33 = vpop.permute.xlu0 %32
    %36 = vset.pattern.permute.xlu0 0
    %37 = vperm.xlu0 %36, %v18
    %v38 = vpop.permute.xlu0 %37
    %41 = vset.pattern.permute.xlu0 0
    %42 = vperm.xlu0 %41, %v19
    %v43 = vpop.permute.xlu0 %42
    %45 = vst.msk [vmem:[#allocation2 + $0x40] sm:$0xff] %vm20, %v28
    %46 = vst.msk [vmem:[#allocation2 + $0x50] sm:$0xff] %vm20, %v33
    %47 = vst.msk [vmem:[#allocation2 + $0x60] sm:$0xff] %vm20, %v38
    %48 = vst.msk [vmem:[#allocation2 + $0x70] sm:$0xff] %vm20, %v43
    %53 = vrot.lane.b32.xlu0 %v12, 16
    %v54 = vpop.permute.xlu0 %53
    %55 = vrot.lane.b32.xlu0 %v13, 16
    %v56 = vpop.permute.xlu0 %55
    %57 = vrot.lane.b32.xlu0 %v14, 16
    %v58 = vpop.permute.xlu0 %57
    %59 = vrot.lane.b32.xlu0 %v15, 16
    %v60 = vpop.permute.xlu0 %59
    %vm65 = vcmask 261248
    %66 = vst.msk [vmem:[#allocation2] sm:$0xff] %vm65, %v54
    %67 = vst.msk [vmem:[#allocation2 + $0x10] sm:$0xff] %vm65, %v56
    %68 = vst.msk [vmem:[#allocation2 + $0x20] sm:$0xff] %vm65, %v58
    %69 = vst.msk [vmem:[#allocation2 + $0x30] sm:$0xff] %vm65, %v60
    %70 = vset.pattern.permute.xlu0 1
    %71 = vperm.xlu0 %70, %v16
    %v72 = vpop.permute.xlu0 %71
    %74 = vset.pattern.permute.xlu0 1
    %75 = vperm.xlu0 %74, %v17
    %v76 = vpop.permute.xlu0 %75
    %78 = vset.pattern.permute.xlu0 1
    %79 = vperm.xlu0 %78, %v18
    %v80 = vpop.permute.xlu0 %79
    %82 = vset.pattern.permute.xlu0 1
    %83 = vperm.xlu0 %82, %v19
    %v84 = vpop.permute.xlu0 %83
    %86 = vst.msk [vmem:[#allocation2 + $0x40] sm:$0xff] %vm65, %v72
    %87 = vst.msk [vmem:[#allocation2 + $0x50] sm:$0xff] %vm65, %v76
    %88 = vst.msk [vmem:[#allocation2 + $0x60] sm:$0xff] %vm65, %v80
    %89 = vst.msk [vmem:[#allocation2 + $0x70] sm:$0xff] %vm65, %v84
    %90 = vrot.lane.b32.xlu0 %v12, 32
    %v91 = vpop.permute.xlu0 %90
    %92 = vrot.lane.b32.xlu0 %v13, 32
    %v93 = vpop.permute.xlu0 %92
    %94 = vrot.lane.b32.xlu0 %v14, 32
    %v95 = vpop.permute.xlu0 %94
    %96 = vrot.lane.b32.xlu0 %v15, 32
    %v97 = vpop.permute.xlu0 %96
    %vm102 = vcmask 392448
    %103 = vst.msk [vmem:[#allocation2] sm:$0xff] %vm102, %v91
    %104 = vst.msk [vmem:[#allocation2 + $0x10] sm:$0xff] %vm102, %v93
    %105 = vst.msk [vmem:[#allocation2 + $0x20] sm:$0xff] %vm102, %v95
    %106 = vst.msk [vmem:[#allocation2 + $0x30] sm:$0xff] %vm102, %v97
    %107 = vset.pattern.permute.xlu0 2
    %108 = vperm.xlu0 %107, %v16
    %v109 = vpop.permute.xlu0 %108
    %111 = vset.pattern.permute.xlu0 2
    %112 = vperm.xlu0 %111, %v17
    %v113 = vpop.permute.xlu0 %112
    %115 = vset.pattern.permute.xlu0 2
    %116 = vperm.xlu0 %115, %v18
    %v117 = vpop.permute.xlu0 %116
    %119 = vset.pattern.permute.xlu0 2
    %120 = vperm.xlu0 %119, %v19
    %v121 = vpop.permute.xlu0 %120
    %123 = vst.msk [vmem:[#allocation2 + $0x40] sm:$0xff] %vm102, %v109
    %124 = vst.msk [vmem:[#allocation2 + $0x50] sm:$0xff] %vm102, %v113
    %125 = vst.msk [vmem:[#allocation2 + $0x60] sm:$0xff] %vm102, %v117
    %126 = vst.msk [vmem:[#allocation2 + $0x70] sm:$0xff] %vm102, %v121
    %127 = vrot.lane.b32.xlu0 %v12, 48
    %v128 = vpop.permute.xlu0 %127
    %129 = vrot.lane.b32.xlu0 %v13, 48
    %v130 = vpop.permute.xlu0 %129
    %131 = vrot.lane.b32.xlu0 %v14, 48
    %v132 = vpop.permute.xlu0 %131
    %133 = vrot.lane.b32.xlu0 %v15, 48
    %v134 = vpop.permute.xlu0 %133
    %vm139 = vcmask 523648
    %140 = vst.msk [vmem:[#allocation2] sm:$0xff] %vm139, %v128
    %141 = vst.msk [vmem:[#allocation2 + $0x10] sm:$0xff] %vm139, %v130
    %142 = vst.msk [vmem:[#allocation2 + $0x20] sm:$0xff] %vm139, %v132
    %143 = vst.msk [vmem:[#allocation2 + $0x30] sm:$0xff] %vm139, %v134
    %144 = vset.pattern.permute.xlu0 3
    %145 = vperm.xlu0 %144, %v16
    %v146 = vpop.permute.xlu0 %145
    %148 = vset.pattern.permute.xlu0 3
    %149 = vperm.xlu0 %148, %v17
    %v150 = vpop.permute.xlu0 %149
    %152 = vset.pattern.permute.xlu0 3
    %153 = vperm.xlu0 %152, %v18
    %v154 = vpop.permute.xlu0 %153
    %156 = vset.pattern.permute.xlu0 3
    %157 = vperm.xlu0 %156, %v19
    %v158 = vpop.permute.xlu0 %157
    %160 = vst.msk [vmem:[#allocation2 + $0x40] sm:$0xff] %vm139, %v146
    %161 = vst.msk [vmem:[#allocation2 + $0x50] sm:$0xff] %vm139, %v150
    %162 = vst.msk [vmem:[#allocation2 + $0x60] sm:$0xff] %vm139, %v154
    %163 = vst.msk [vmem:[#allocation2 + $0x70] sm:$0xff] %vm139, %v158
    %164 = vrot.lane.b32.xlu0 %v12, 64
    %v165 = vpop.permute.xlu0 %164
    %166 = vrot.lane.b32.xlu0 %v13, 64
    %v167 = vpop.permute.xlu0 %166
    %168 = vrot.lane.b32.xlu0 %v14, 64
    %v169 = vpop.permute.xlu0 %168
    %170 = vrot.lane.b32.xlu0 %v15, 64
    %v171 = vpop.permute.xlu0 %170
    %vm176 = vcmask 654848
    %177 = vst.msk [vmem:[#allocation2] sm:$0xff] %vm176, %v165
    %178 = vst.msk [vmem:[#allocation2 + $0x10] sm:$0xff] %vm176, %v167
    %179 = vst.msk [vmem:[#allocation2 + $0x20] sm:$0xff] %vm176, %v169
    %180 = vst.msk [vmem:[#allocation2 + $0x30] sm:$0xff] %vm176, %v171
    %181 = vset.pattern.permute.xlu0 4
    %182 = vperm.xlu0 %181, %v16
    %v183 = vpop.permute.xlu0 %182
    %185 = vset.pattern.permute.xlu0 4
    %186 = vperm.xlu0 %185, %v17
    %v187 = vpop.permute.xlu0 %186
    %189 = vset.pattern.permute.xlu0 4
    %190 = vperm.xlu0 %189, %v18
    %v191 = vpop.permute.xlu0 %190
    %193 = vset.pattern.permute.xlu0 4
    %194 = vperm.xlu0 %193, %v19
    %v195 = vpop.permute.xlu0 %194
    %197 = vst.msk [vmem:[#allocation2 + $0x40] sm:$0xff] %vm176, %v183
    %198 = vst.msk [vmem:[#allocation2 + $0x50] sm:$0xff] %vm176, %v187
    %199 = vst.msk [vmem:[#allocation2 + $0x60] sm:$0xff] %vm176, %v191
    %200 = vst.msk [vmem:[#allocation2 + $0x70] sm:$0xff] %vm176, %v195
    %201 = vrot.lane.b32.xlu0 %v12, 80
    %v202 = vpop.permute.xlu0 %201
    %203 = vrot.lane.b32.xlu0 %v13, 80
    %v204 = vpop.permute.xlu0 %203
    %205 = vrot.lane.b32.xlu0 %v14, 80
    %v206 = vpop.permute.xlu0 %205
    %207 = vrot.lane.b32.xlu0 %v15, 80
    %v208 = vpop.permute.xlu0 %207
    %vm213 = vcmask 786048
    %214 = vst.msk [vmem:[#allocation2] sm:$0xff] %vm213, %v202
    %215 = vst.msk [vmem:[#allocation2 + $0x10] sm:$0xff] %vm213, %v204
    %216 = vst.msk [vmem:[#allocation2 + $0x20] sm:$0xff] %vm213, %v206
    %217 = vst.msk [vmem:[#allocation2 + $0x30] sm:$0xff] %vm213, %v208
    %218 = vset.pattern.permute.xlu0 5
    %219 = vperm.xlu0 %218, %v16
    %v220 = vpop.permute.xlu0 %219
    %222 = vset.pattern.permute.xlu0 5
    %223 = vperm.xlu0 %222, %v17
    %v224 = vpop.permute.xlu0 %223
    %226 = vset.pattern.permute.xlu0 5
    %227 = vperm.xlu0 %226, %v18
    %v228 = vpop.permute.xlu0 %227
    %230 = vset.pattern.permute.xlu0 5
    %231 = vperm.xlu0 %230, %v19
    %v232 = vpop.permute.xlu0 %231
    %234 = vst.msk [vmem:[#allocation2 + $0x40] sm:$0xff] %vm213, %v220
    %235 = vst.msk [vmem:[#allocation2 + $0x50] sm:$0xff] %vm213, %v224
    %236 = vst.msk [vmem:[#allocation2 + $0x60] sm:$0xff] %vm213, %v228
    %237 = vst.msk [vmem:[#allocation2 + $0x70] sm:$0xff] %vm213, %v232
    %238 = vrot.lane.b32.xlu0 %v12, 96
    %v239 = vpop.permute.xlu0 %238
    %240 = vrot.lane.b32.xlu0 %v13, 96
    %v241 = vpop.permute.xlu0 %240
    %242 = vrot.lane.b32.xlu0 %v14, 96
    %v243 = vpop.permute.xlu0 %242
    %244 = vrot.lane.b32.xlu0 %v15, 96
    %v245 = vpop.permute.xlu0 %244
    %vm250 = vcmask 917248
    %251 = vst.msk [vmem:[#allocation2] sm:$0xff] %vm250, %v239
    %252 = vst.msk [vmem:[#allocation2 + $0x10] sm:$0xff] %vm250, %v241
    %253 = vst.msk [vmem:[#allocation2 + $0x20] sm:$0xff] %vm250, %v243
    %254 = vst.msk [vmem:[#allocation2 + $0x30] sm:$0xff] %vm250, %v245
    %255 = vset.pattern.permute.xlu0 6
    %256 = vperm.xlu0 %255, %v16
    %v257 = vpop.permute.xlu0 %256
    %259 = vset.pattern.permute.xlu0 6
    %260 = vperm.xlu0 %259, %v17
    %v261 = vpop.permute.xlu0 %260
    %263 = vset.pattern.permute.xlu0 6
    %264 = vperm.xlu0 %263, %v18
    %v265 = vpop.permute.xlu0 %264
    %267 = vset.pattern.permute.xlu0 6
    %268 = vperm.xlu0 %267, %v19
    %v269 = vpop.permute.xlu0 %268
    %271 = vst.msk [vmem:[#allocation2 + $0x40] sm:$0xff] %vm250, %v257
    %272 = vst.msk [vmem:[#allocation2 + $0x50] sm:$0xff] %vm250, %v261
    %273 = vst.msk [vmem:[#allocation2 + $0x60] sm:$0xff] %vm250, %v265
    %274 = vst.msk [vmem:[#allocation2 + $0x70] sm:$0xff] %vm250, %v269
    %275 = vrot.lane.b32.xlu0 %v12, 112
    %v276 = vpop.permute.xlu0 %275
    %277 = vrot.lane.b32.xlu0 %v13, 112
    %v278 = vpop.permute.xlu0 %277
    %279 = vrot.lane.b32.xlu0 %v14, 112
    %v280 = vpop.permute.xlu0 %279
    %281 = vrot.lane.b32.xlu0 %v15, 112
    %v282 = vpop.permute.xlu0 %281
    %vm287 = vcmask 1048448
    %288 = vst.msk [vmem:[#allocation2] sm:$0xff] %vm287, %v276
    %289 = vst.msk [vmem:[#allocation2 + $0x10] sm:$0xff] %vm287, %v278
    %290 = vst.msk [vmem:[#allocation2 + $0x20] sm:$0xff] %vm287, %v280
    %291 = vst.msk [vmem:[#allocation2 + $0x30] sm:$0xff] %vm287, %v282
    %292 = vset.pattern.permute.xlu0 7
    %293 = vperm.xlu0 %292, %v16
    %v294 = vpop.permute.xlu0 %293
    %296 = vset.pattern.permute.xlu0 7
    %297 = vperm.xlu0 %296, %v17
    %v298 = vpop.permute.xlu0 %297
    %300 = vset.pattern.permute.xlu0 7
    %301 = vperm.xlu0 %300, %v18
    %v302 = vpop.permute.xlu0 %301
    %304 = vset.pattern.permute.xlu0 7
    %305 = vperm.xlu0 %304, %v19
    %v306 = vpop.permute.xlu0 %305
    %308 = vst.msk [vmem:[#allocation2 + $0x40] sm:$0xff] %vm287, %v294
    %309 = vst.msk [vmem:[#allocation2 + $0x50] sm:$0xff] %vm287, %v298
    %310 = vst.msk [vmem:[#allocation2 + $0x60] sm:$0xff] %vm287, %v302
    %311 = vst.msk [vmem:[#allocation2 + $0x70] sm:$0xff] %vm287, %v306
    %312 = vst.msk [vmem:[#allocation2 + $0x8] sm:$0xff] %vm20, %v12
    %313 = vst.msk [vmem:[#allocation2 + $0x18] sm:$0xff] %vm20, %v13
    %314 = vst.msk [vmem:[#allocation2 + $0x28] sm:$0xff] %vm20, %v14
    %315 = vst.msk [vmem:[#allocation2 + $0x38] sm:$0xff] %vm20, %v15
    %316 = vset.pattern.permute.xlu0 8
    %317 = vperm.xlu0 %316, %v16
    %v318 = vpop.permute.xlu0 %317
    %320 = vset.pattern.permute.xlu0 8
    %321 = vperm.xlu0 %320, %v17
    %v322 = vpop.permute.xlu0 %321
    %324 = vset.pattern.permute.xlu0 8
    %325 = vperm.xlu0 %324, %v18
    %v326 = vpop.permute.xlu0 %325
    %328 = vset.pattern.permute.xlu0 8
    %329 = vperm.xlu0 %328, %v19
    %v330 = vpop.permute.xlu0 %329
    %332 = vst.msk [vmem:[#allocation2 + $0x48] sm:$0xff] %vm20, %v318
    %333 = vst.msk [vmem:[#allocation2 + $0x58] sm:$0xff] %vm20, %v322
    %334 = vst.msk [vmem:[#allocation2 + $0x68] sm:$0xff] %vm20, %v326
    %335 = vst.msk [vmem:[#allocation2 + $0x78] sm:$0xff] %vm20, %v330
    %336 = vst.msk [vmem:[#allocation2 + $0x8] sm:$0xff] %vm65, %v54
    %337 = vst.msk [vmem:[#allocation2 + $0x18] sm:$0xff] %vm65, %v56
    %338 = vst.msk [vmem:[#allocation2 + $0x28] sm:$0xff] %vm65, %v58
    %339 = vst.msk [vmem:[#allocation2 + $0x38] sm:$0xff] %vm65, %v60
    %340 = vset.pattern.permute.xlu0 9
    %341 = vperm.xlu0 %340, %v16
    %v342 = vpop.permute.xlu0 %341
    %344 = vset.pattern.permute.xlu0 9
    %345 = vperm.xlu0 %344, %v17
    %v346 = vpop.permute.xlu0 %345
    %348 = vset.pattern.permute.xlu0 9
    %349 = vperm.xlu0 %348, %v18
    %v350 = vpop.permute.xlu0 %349
    %352 = vset.pattern.permute.xlu0 9
    %353 = vperm.xlu0 %352, %v19
    %v354 = vpop.permute.xlu0 %353
    %356 = vst.msk [vmem:[#allocation2 + $0x48] sm:$0xff] %vm65, %v342
    %357 = vst.msk [vmem:[#allocation2 + $0x58] sm:$0xff] %vm65, %v346
    %358 = vst.msk [vmem:[#allocation2 + $0x68] sm:$0xff] %vm65, %v350
    %359 = vst.msk [vmem:[#allocation2 + $0x78] sm:$0xff] %vm65, %v354
    %360 = vst.msk [vmem:[#allocation2 + $0x8] sm:$0xff] %vm102, %v91
    %361 = vst.msk [vmem:[#allocation2 + $0x18] sm:$0xff] %vm102, %v93
    %362 = vst.msk [vmem:[#allocation2 + $0x28] sm:$0xff] %vm102, %v95
    %363 = vst.msk [vmem:[#allocation2 + $0x38] sm:$0xff] %vm102, %v97
    %364 = vset.pattern.permute.xlu0 10
    %365 = vperm.xlu0 %364, %v16
    %v366 = vpop.permute.xlu0 %365
    %368 = vset.pattern.permute.xlu0 10
    %369 = vperm.xlu0 %368, %v17
    %v370 = vpop.permute.xlu0 %369
    %372 = vset.pattern.permute.xlu0 10
    %373 = vperm.xlu0 %372, %v18
    %v374 = vpop.permute.xlu0 %373
    %376 = vset.pattern.permute.xlu0 10
    %377 = vperm.xlu0 %376, %v19
    %v378 = vpop.permute.xlu0 %377
    %380 = vst.msk [vmem:[#allocation2 + $0x48] sm:$0xff] %vm102, %v366
    %381 = vst.msk [vmem:[#allocation2 + $0x58] sm:$0xff] %vm102, %v370
    %382 = vst.msk [vmem:[#allocation2 + $0x68] sm:$0xff] %vm102, %v374
    %383 = vst.msk [vmem:[#allocation2 + $0x78] sm:$0xff] %vm102, %v378
    %384 = vst.msk [vmem:[#allocation2 + $0x8] sm:$0xff] %vm139, %v128
    %385 = vst.msk [vmem:[#allocation2 + $0x18] sm:$0xff] %vm139, %v130
    %386 = vst.msk [vmem:[#allocation2 + $0x28] sm:$0xff] %vm139, %v132
    %387 = vst.msk [vmem:[#allocation2 + $0x38] sm:$0xff] %vm139, %v134
    %388 = vset.pattern.permute.xlu0 11
    %389 = vperm.xlu0 %388, %v16
    %v390 = vpop.permute.xlu0 %389
    %392 = vset.pattern.permute.xlu0 11
    %393 = vperm.xlu0 %392, %v17
    %v394 = vpop.permute.xlu0 %393
    %396 = vset.pattern.permute.xlu0 11
    %397 = vperm.xlu0 %396, %v18
    %v398 = vpop.permute.xlu0 %397
    %400 = vset.pattern.permute.xlu0 11
    %401 = vperm.xlu0 %400, %v19
    %v402 = vpop.permute.xlu0 %401
    %404 = vst.msk [vmem:[#allocation2 + $0x48] sm:$0xff] %vm139, %v390
    %405 = vst.msk [vmem:[#allocation2 + $0x58] sm:$0xff] %vm139, %v394
    %406 = vst.msk [vmem:[#allocation2 + $0x68] sm:$0xff] %vm139, %v398
    %407 = vst.msk [vmem:[#allocation2 + $0x78] sm:$0xff] %vm139, %v402
    %408 = vst.msk [vmem:[#allocation2 + $0x8] sm:$0xff] %vm176, %v165
    %409 = vst.msk [vmem:[#allocation2 + $0x18] sm:$0xff] %vm176, %v167
    %410 = vst.msk [vmem:[#allocation2 + $0x28] sm:$0xff] %vm176, %v169
    %411 = vst.msk [vmem:[#allocation2 + $0x38] sm:$0xff] %vm176, %v171
    %412 = vset.pattern.permute.xlu0 12
    %413 = vperm.xlu0 %412, %v16
    %v414 = vpop.permute.xlu0 %413
    %416 = vset.pattern.permute.xlu0 12
    %417 = vperm.xlu0 %416, %v17
    %v418 = vpop.permute.xlu0 %417
    %420 = vset.pattern.permute.xlu0 12
    %421 = vperm.xlu0 %420, %v18
    %v422 = vpop.permute.xlu0 %421
    %424 = vset.pattern.permute.xlu0 12
    %425 = vperm.xlu0 %424, %v19
    %v426 = vpop.permute.xlu0 %425
    %428 = vst.msk [vmem:[#allocation2 + $0x48] sm:$0xff] %vm176, %v414
    %429 = vst.msk [vmem:[#allocation2 + $0x58] sm:$0xff] %vm176, %v418
    %430 = vst.msk [vmem:[#allocation2 + $0x68] sm:$0xff] %vm176, %v422
    %431 = vst.msk [vmem:[#allocation2 + $0x78] sm:$0xff] %vm176, %v426
    %432 = vst.msk [vmem:[#allocation2 + $0x8] sm:$0xff] %vm213, %v202
    %433 = vst.msk [vmem:[#allocation2 + $0x18] sm:$0xff] %vm213, %v204
    %434 = vst.msk [vmem:[#allocation2 + $0x28] sm:$0xff] %vm213, %v206
    %435 = vst.msk [vmem:[#allocation2 + $0x38] sm:$0xff] %vm213, %v208
    %436 = vset.pattern.permute.xlu0 13
    %437 = vperm.xlu0 %436, %v16
    %v438 = vpop.permute.xlu0 %437
    %440 = vset.pattern.permute.xlu0 13
    %441 = vperm.xlu0 %440, %v17
    %v442 = vpop.permute.xlu0 %441
    %444 = vset.pattern.permute.xlu0 13
    %445 = vperm.xlu0 %444, %v18
    %v446 = vpop.permute.xlu0 %445
    %448 = vset.pattern.permute.xlu0 13
    %449 = vperm.xlu0 %448, %v19
    %v450 = vpop.permute.xlu0 %449
    %452 = vst.msk [vmem:[#allocation2 + $0x48] sm:$0xff] %vm213, %v438
    %453 = vst.msk [vmem:[#allocation2 + $0x58] sm:$0xff] %vm213, %v442
    %454 = vst.msk [vmem:[#allocation2 + $0x68] sm:$0xff] %vm213, %v446
    %455 = vst.msk [vmem:[#allocation2 + $0x78] sm:$0xff] %vm213, %v450
    %456 = vst.msk [vmem:[#allocation2 + $0x8] sm:$0xff] %vm250, %v239
    %457 = vst.msk [vmem:[#allocation2 + $0x18] sm:$0xff] %vm250, %v241
    %458 = vst.msk [vmem:[#allocation2 + $0x28] sm:$0xff] %vm250, %v243
    %459 = vst.msk [vmem:[#allocation2 + $0x38] sm:$0xff] %vm250, %v245
    %460 = vset.pattern.permute.xlu0 14
    %461 = vperm.xlu0 %460, %v16
    %v462 = vpop.permute.xlu0 %461
    %464 = vset.pattern.permute.xlu0 14
    %465 = vperm.xlu0 %464, %v17
    %v466 = vpop.permute.xlu0 %465
    %468 = vset.pattern.permute.xlu0 14
    %469 = vperm.xlu0 %468, %v18
    %v470 = vpop.permute.xlu0 %469
    %472 = vset.pattern.permute.xlu0 14
    %473 = vperm.xlu0 %472, %v19
    %v474 = vpop.permute.xlu0 %473
    %476 = vst.msk [vmem:[#allocation2 + $0x48] sm:$0xff] %vm250, %v462
    %477 = vst.msk [vmem:[#allocation2 + $0x58] sm:$0xff] %vm250, %v466
    %478 = vst.msk [vmem:[#allocation2 + $0x68] sm:$0xff] %vm250, %v470
    %479 = vst.msk [vmem:[#allocation2 + $0x78] sm:$0xff] %vm250, %v474
    %480 = vst.msk [vmem:[#allocation2 + $0x8] sm:$0xff] %vm287, %v276
    %481 = vst.msk [vmem:[#allocation2 + $0x18] sm:$0xff] %vm287, %v278
    %482 = vst.msk [vmem:[#allocation2 + $0x28] sm:$0xff] %vm287, %v280
    %483 = vst.msk [vmem:[#allocation2 + $0x38] sm:$0xff] %vm287, %v282
    %484 = vset.pattern.permute.xlu0 15
    %485 = vperm.xlu0 %484, %v16
    %v486 = vpop.permute.xlu0 %485
    %488 = vset.pattern.permute.xlu0 15
    %489 = vperm.xlu0 %488, %v17
    %v490 = vpop.permute.xlu0 %489
    %492 = vset.pattern.permute.xlu0 15
    %493 = vperm.xlu0 %492, %v18
    %v494 = vpop.permute.xlu0 %493
    %496 = vset.pattern.permute.xlu0 15
    %497 = vperm.xlu0 %496, %v19
    %v498 = vpop.permute.xlu0 %497
    %500 = vst.msk [vmem:[#allocation2 + $0x48] sm:$0xff] %vm287, %v486
    %501 = vst.msk [vmem:[#allocation2 + $0x58] sm:$0xff] %vm287, %v490
    %502 = vst.msk [vmem:[#allocation2 + $0x68] sm:$0xff] %vm287, %v494
    %503 = vst.msk [vmem:[#allocation2 + $0x78] sm:$0xff] %vm287, %v498
    // Predicated region
    $region10: #{tpu_custom_call.1} parent=1 // pred_check
      _
    $region11: #{tpu_custom_call.1} parent=1 // pred_check_branch
      %505 = sbr.rel (0) target = $region13
    $region12: #{tpu_custom_call.1} parent=1 // pred_region
      %507 = vsyncadd [#allocation3], 0
      %s508 = sshll.u32 [#allocation2], 4
      %s509 = int_to_ptr.vmem [resolvable:$true] %s508
      %s510 = sshll.u32 %s2, 4
      %s511 = int_to_ptr.hbm [resolvable:$true] %s510
      %516 = dma.vmem_to_hbm [thread:$0]  %s509, 2048, %s511, [#allocation3], 256, 256, 16
    $region13: #{tpu_custom_call.1} parent=1 // pred_fallthru
      _
    // Predicated region
    $region14: #{tpu_custom_call.1} parent=1 // pred_check
      _
    $region15: #{tpu_custom_call.1} parent=1 // pred_check_branch
      %518 = sbr.rel (0) target = $region17
    $region16: #{tpu_custom_call.1} parent=1 // pred_region
      %520 = dma.done [#allocation3], 2048
    $region17: #{tpu_custom_call.1} parent=1 // pred_fallthru
      _
    %521 = vsyncpa [#allocation3], 1

</llo_original>
